<compile_context>
chip_gen: v7x
topology: tpu7x:2x2x1
jax: 0.10.0
libtpu: 0.0.40
codegen_flags: <defaults>
</compile_context>

<pallas_src>
import functools

import jax
import jax.numpy as jnp
from jax.experimental import pallas as pl
from jax.experimental.pallas import tpu as pltpu

K_FEATURES = 2048


# ----------------------------- kernels --------------------------------------

def _linear_kernel(x_ref, w_ref, b_ref, o_ref):
    """Eval mode (dropout == identity): out = x @ w.T + b, all lane-dense along K."""
    acc = jax.lax.dot_general(
        x_ref[...], w_ref[...],                      # (B, 2048) . (N_pad, 2048)
        dimension_numbers=(((1,), (1,)), ((), ())),  # contract K with K -> (B, N_pad)
        preferred_element_type=jnp.float32)
    o_ref[...] = acc + b_ref[...]                    # b: (1, N_pad) broadcast


def _linear_dropout_kernel(mask_ref, x_ref, w_ref, b_ref, o_ref):
    """Training mode: inverted dropout; 2.0 scale folded into the (B, N) accumulator."""
    x = x_ref[...] * mask_ref[...]                   # unscaled masked activations
    acc = jax.lax.dot_general(
        x, w_ref[...],
        dimension_numbers=(((1,), (1,)), ((), ())),
        preferred_element_type=jnp.float32)
    o_ref[...] = acc * jnp.float32(2.0) + b_ref[...]


# ----------------------------- param prep (run once, outside jit) ------------

def prepare_params(weight, bias):
    """Pad num_class up to a multiple of 128; keep weight as (N_pad, 2048).

    Keeping K=2048 on the lane axis avoids a per-call transpose op and a
    lane-sparse (2048, num_class) operand; padding N to 128 makes the output
    store a single unmasked lane-dense vreg tile.
    """
    num_class, k = weight.shape
    assert k == K_FEATURES
    n_pad = ((num_class + 127) // 128) * 128
    w_p = jnp.zeros((n_pad, k), jnp.float32).at[:num_class, :].set(
        weight.astype(jnp.float32))
    b_p = jnp.zeros((1, n_pad), jnp.float32).at[0, :num_class].set(
        bias.astype(jnp.float32))
    return w_p, b_p


# ----------------------------- forward ---------------------------------------

@functools.partial(jax.jit, static_argnames=("num_class", "training"))
def classifier2_forward(x_nchw, w_pad, b_pad, dropout_key, *, num_class, training=False):
    """Forward pass of Classifier2.

    x_nchw : (B, C, H, W) float32 contiguous with C*H*W == 2048
    w_pad  : (N_pad, 2048) float32  (pre-padded, PyTorch row layout)
    b_pad  : (1, N_pad)    float32  (pre-padded)
    dropout_key : jax PRNG key (ignored when training=False)
    """
    B = x_nchw.shape[0]
    x = x_nchw.reshape(B, -1)                         # row-major flatten == torch .view
    assert x.shape[1] == K_FEATURES
    n_pad = w_pad.shape[0]

    out_shape = jax.ShapeDtypeStruct((B, n_pad), jnp.float32)
    vmem = pl.BlockSpec(memory_space=pltpu.MemorySpace.VMEM)

    if training:
        keep = jax.random.bernoulli(dropout_key, 0.5, x.shape).astype(jnp.float32)
        out = pl.pallas_call(
            _linear_dropout_kernel,
            out_shape=out_shape,
            in_specs=[vmem, vmem, vmem, vmem],
            out_specs=vmem,
        )(keep, x, w_pad, b_pad)
    else:
        out = pl.pallas_call(
            _linear_kernel,
            out_shape=out_shape,
            in_specs=[vmem, vmem, vmem],
            out_specs=vmem,
        )(x, w_pad, b_pad)

    return out[:, :num_class]


# ----------------------------- main ------------------------------------------

if __name__ == "__main__":
    num_class = 4
    B, C, H, W = 2, 512, 2, 2          # C*H*W = 2048, matching nn.Linear(2048, num_class)

    key = jax.random.PRNGKey(0)
    kx, kw, kb, kdrop = jax.random.split(key, 4)

    # Deterministic parameter init mimicking PyTorch's nn.Linear default:
    # U(-1/sqrt(in_features), 1/sqrt(in_features))
    bound = 1.0 / jnp.sqrt(2048.0)
    weight = jax.random.uniform(kw, (num_class, 2048), jnp.float32, -bound, bound)
    bias = jax.random.uniform(kb, (num_class,), jnp.float32, -bound, bound)

    x = jax.random.normal(kx, (B, C, H, W), dtype=jnp.float32)

    # One-time parameter prep (outside the jitted forward).
    w_pad, b_pad = prepare_params(weight, bias)

    # --- Eval-mode forward (dropout == identity): check against pure-JAX reference.
    out = classifier2_forward(x, w_pad, b_pad, kdrop,
                              num_class=num_class, training=False)
    out = jax.block_until_ready(out)

    x_flat = x.reshape(B, -1)
    ref = x_flat @ weight.T + bias
    assert out.shape == (B, num_class)
    assert jnp.allclose(out, ref, atol=1e-4, rtol=1e-4), "eval mismatch vs JAX reference"

    # --- Training-mode forward: same mask is reproducible from the key, so verify too.
    out_train = classifier2_forward(x, w_pad, b_pad, kdrop,
                                    num_class=num_class, training=True)
    out_train = jax.block_until_ready(out_train)

    keep_ref = jax.random.bernoulli(kdrop, 0.5, x_flat.shape).astype(jnp.float32)
    ref_train = (x_flat * keep_ref) @ weight.T * 2.0 + bias
    assert out_train.shape == (B, num_class)
    assert jnp.allclose(out_train, ref_train, atol=1e-4, rtol=1e-4), \
        "train mismatch vs JAX reference"

    print("KERNEL_OK")
</pallas_src>

<mosaic_0001>
module attributes {stable_mosaic.version = 11 : i64} {
  func.func @_linear_kernel(%arg0: memref<2x2048xf32, #tpu.memory_space<vmem>>, %arg1: memref<128x2048xf32, #tpu.memory_space<vmem>>, %arg2: memref<1x128xf32, #tpu.memory_space<vmem>>, %arg3: memref<2x128xf32, #tpu.memory_space<vmem>>) attributes {dimension_semantics = [], scalar_prefetch = 0 : i64, scratch_operands = 0 : i64, tpu.core_type = #tpu.core_type<tc>} {
    %c0 = arith.constant 0 : index
    %c0_0 = arith.constant 0 : index
    %0 = vector.load %arg0[%c0, %c0_0] : memref<2x2048xf32, #tpu.memory_space<vmem>>, vector<2x2048xf32>
    %c0_1 = arith.constant 0 : index
    %c0_2 = arith.constant 0 : index
    %1 = vector.load %arg1[%c0_1, %c0_2] : memref<128x2048xf32, #tpu.memory_space<vmem>>, vector<128x2048xf32>
    %cst = arith.constant dense<0.000000e+00> : vector<2x128xf32>
    %2 = tpu.matmul %0, %1, %cst {dimension_numbers = #tpu.dot_dimension_numbers<[1], [1], [0], [0], [0, 0, 1, 0], [], []>} : vector<2x2048xf32>, vector<128x2048xf32>, vector<2x128xf32> -> vector<2x128xf32>
    %c0_3 = arith.constant 0 : index
    %c0_4 = arith.constant 0 : index
    %3 = vector.load %arg2[%c0_3, %c0_4] : memref<1x128xf32, #tpu.memory_space<vmem>>, vector<1x128xf32>
    %4 = vector.broadcast %3 : vector<1x128xf32> to vector<2x128xf32>
    %5 = arith.addf %2, %4 : vector<2x128xf32>
    %c0_5 = arith.constant 0 : index
    %c0_6 = arith.constant 0 : index
    %6 = vector.load %arg3[%c0_5, %c0_6] : memref<2x128xf32, #tpu.memory_space<vmem>>, vector<2x128xf32>
    tpu.vector_store %arg3[%c0_5, %c0_6], %5 {strides = array<i32>} : memref<2x128xf32, #tpu.memory_space<vmem>>, vector<2x128xf32>,
    return
  }
}

</mosaic_0001>

<llo_original>
// kernel: classifier2_forward.1
$region0: #{classifier2_forward.1}
  #allocation0 [shape = 'u32[]', space=smem, size = 0x4, offset = 0x4, fixed_abs, tag = 'smem constant byte address 0x4 - core index']
  #allocation1 [shape = 'u32[144,128]{1,0:T(1,128)}', space=vmem, size = 0x12000, scoped, tag = 'internal scratch']
  %s0 = inlined_call_operand.vmem [shape: f32[2,2048], index: 0, kind: input, shape index: {}]
  %s1 = inlined_call_operand.vmem [shape: f32[128,2048], index: 1, kind: input, shape index: {}]
  %s2 = inlined_call_operand.vmem [shape: f32[1,128], index: 2, kind: input, shape index: {}]
  %s3 = inlined_call_operand.hbm [shape: f32[2,128], index: 3, kind: output, shape index: {}]
  %s4 = sld [smem:[#allocation0]]
  $region22: #{classifier2_forward.1} parent=0
    _
  %s6 = ssub.s32 1, %s4
  %s7 = scalar_select 0, %s6, %s4
  $region1: #{classifier2_forward.1} parent=0
    #allocation2 [shape = 'u8[1024]{0}', space=vmem, size = 0x400, scoped, tag = 'output window, operand 0, single buffered']
    #allocation3 [shape = 's32[1]{0}', space=sflag, size = 0x4, scoped, tag = 'scoped memory for classifier2_forward.1']
    %8 = vsyncpa [#allocation3], 0
    // Predicated region
    $region2: #{classifier2_forward.1} parent=1 // pred_check
      _
    $region3: #{classifier2_forward.1} parent=1 // pred_check_branch
      %10 = sbr.rel (0) target = $region5
    $region4: #{classifier2_forward.1} parent=1 // pred_region
      _
    $region5: #{classifier2_forward.1} parent=1 // pred_fallthru
      _
    // Predicated region
    $region6: #{classifier2_forward.1} parent=1 // pred_check
      _
    $region7: #{classifier2_forward.1} parent=1 // pred_check_branch
      %12 = sbr.rel (0) target = $region9
    $region8: #{classifier2_forward.1} parent=1 // pred_region
      _
    $region9: #{classifier2_forward.1} parent=1 // pred_fallthru
      _
    // Predicated region
    $region10: #{classifier2_forward.1} parent=1 // pred_check
      _
    $region11: #{classifier2_forward.1} parent=1 // pred_check_branch
      %14 = sbr.rel (0) target = $region13
    $region12: #{classifier2_forward.1} parent=1 // pred_region
      _
    $region13: #{classifier2_forward.1} parent=1 // pred_fallthru
      _
    %v15 = vld [vmem:[%s0] sm:$0xff]
    %v16 = vld [vmem:[%s0 + $0x8] sm:$0xff]
    %v17 = vld [vmem:[%s0 + $0x10] sm:$0xff]
    %v18 = vld [vmem:[%s0 + $0x18] sm:$0xff]
    %v19 = vld [vmem:[%s1] sm:$0xff]
    %v20 = vld [vmem:[%s1 + $0x8] sm:$0xff]
    %v21 = vld [vmem:[%s1 + $0x10] sm:$0xff]
    %v22 = vld [vmem:[%s1 + $0x18] sm:$0xff]
    %v23 = vld [vmem:[%s1 + $0x20] sm:$0xff]
    %v24 = vld [vmem:[%s1 + $0x28] sm:$0xff]
    %v25 = vld [vmem:[%s1 + $0x30] sm:$0xff]
    %v26 = vld [vmem:[%s1 + $0x38] sm:$0xff]
    %v27 = vld [vmem:[%s1 + $0x40] sm:$0xff]
    %v28 = vld [vmem:[%s1 + $0x48] sm:$0xff]
    %v29 = vld [vmem:[%s1 + $0x50] sm:$0xff]
    %v30 = vld [vmem:[%s1 + $0x58] sm:$0xff]
    %v31 = vld [vmem:[%s1 + $0x60] sm:$0xff]
    %v32 = vld [vmem:[%s1 + $0x68] sm:$0xff]
    %v33 = vld [vmem:[%s1 + $0x70] sm:$0xff]
    %v34 = vld [vmem:[%s1 + $0x78] sm:$0xff]
    %v35 = vld [vmem:[%s1 + $0x80] sm:$0xff]
    %v36 = vld [vmem:[%s1 + $0x88] sm:$0xff]
    %v37 = vld [vmem:[%s1 + $0x90] sm:$0xff]
    %v38 = vld [vmem:[%s1 + $0x98] sm:$0xff]
    %v39 = vld [vmem:[%s1 + $0xa0] sm:$0xff]
    %v40 = vld [vmem:[%s1 + $0xa8] sm:$0xff]
    %v41 = vld [vmem:[%s1 + $0xb0] sm:$0xff]
    %v42 = vld [vmem:[%s1 + $0xb8] sm:$0xff]
    %v43 = vld [vmem:[%s1 + $0xc0] sm:$0xff]
    %v44 = vld [vmem:[%s1 + $0xc8] sm:$0xff]
    %v45 = vld [vmem:[%s1 + $0xd0] sm:$0xff]
    %v46 = vld [vmem:[%s1 + $0xd8] sm:$0xff]
    %v47 = vld [vmem:[%s1 + $0xe0] sm:$0xff]
    %v48 = vld [vmem:[%s1 + $0xe8] sm:$0xff]
    %v49 = vld [vmem:[%s1 + $0xf0] sm:$0xff]
    %v50 = vld [vmem:[%s1 + $0xf8] sm:$0xff]
    %v51 = vld [vmem:[%s1 + $0x100] sm:$0xff]
    %v52 = vld [vmem:[%s1 + $0x108] sm:$0xff]
    %v53 = vld [vmem:[%s1 + $0x110] sm:$0xff]
    %v54 = vld [vmem:[%s1 + $0x118] sm:$0xff]
    %v55 = vld [vmem:[%s1 + $0x120] sm:$0xff]
    %v56 = vld [vmem:[%s1 + $0x128] sm:$0xff]
    %v57 = vld [vmem:[%s1 + $0x130] sm:$0xff]
    %v58 = vld [vmem:[%s1 + $0x138] sm:$0xff]
    %v59 = vld [vmem:[%s1 + $0x140] sm:$0xff]
    %v60 = vld [vmem:[%s1 + $0x148] sm:$0xff]
    %v61 = vld [vmem:[%s1 + $0x150] sm:$0xff]
    %v62 = vld [vmem:[%s1 + $0x158] sm:$0xff]
    %v63 = vld [vmem:[%s1 + $0x160] sm:$0xff]
    %v64 = vld [vmem:[%s1 + $0x168] sm:$0xff]
    %v65 = vld [vmem:[%s1 + $0x170] sm:$0xff]
    %v66 = vld [vmem:[%s1 + $0x178] sm:$0xff]
    %v67 = vld [vmem:[%s1 + $0x180] sm:$0xff]
    %v68 = vld [vmem:[%s1 + $0x188] sm:$0xff]
    %v69 = vld [vmem:[%s1 + $0x190] sm:$0xff]
    %v70 = vld [vmem:[%s1 + $0x198] sm:$0xff]
    %v71 = vld [vmem:[%s1 + $0x1a0] sm:$0xff]
    %v72 = vld [vmem:[%s1 + $0x1a8] sm:$0xff]
    %v73 = vld [vmem:[%s1 + $0x1b0] sm:$0xff]
    %v74 = vld [vmem:[%s1 + $0x1b8] sm:$0xff]
    %v75 = vld [vmem:[%s1 + $0x1c0] sm:$0xff]
    %v76 = vld [vmem:[%s1 + $0x1c8] sm:$0xff]
    %v77 = vld [vmem:[%s1 + $0x1d0] sm:$0xff]
    %v78 = vld [vmem:[%s1 + $0x1d8] sm:$0xff]
    %v79 = vld [vmem:[%s1 + $0x1e0] sm:$0xff]
    %v80 = vld [vmem:[%s1 + $0x1e8] sm:$0xff]
    %v81 = vld [vmem:[%s1 + $0x1f0] sm:$0xff]
    %v82 = vld [vmem:[%s1 + $0x1f8] sm:$0xff]
    %v83 = vld [vmem:[%s1 + $0x200] sm:$0xff]
    %v84 = vld [vmem:[%s1 + $0x208] sm:$0xff]
    %v85 = vld [vmem:[%s1 + $0x210] sm:$0xff]
    %v86 = vld [vmem:[%s1 + $0x218] sm:$0xff]
    %v87 = vld [vmem:[%s1 + $0x220] sm:$0xff]
    %v88 = vld [vmem:[%s1 + $0x228] sm:$0xff]
    %v89 = vld [vmem:[%s1 + $0x230] sm:$0xff]
    %v90 = vld [vmem:[%s1 + $0x238] sm:$0xff]
    %v91 = vld [vmem:[%s1 + $0x240] sm:$0xff]
    %v92 = vld [vmem:[%s1 + $0x248] sm:$0xff]
    %v93 = vld [vmem:[%s1 + $0x250] sm:$0xff]
    %v94 = vld [vmem:[%s1 + $0x258] sm:$0xff]
    %v95 = vld [vmem:[%s1 + $0x260] sm:$0xff]
    %v96 = vld [vmem:[%s1 + $0x268] sm:$0xff]
    %v97 = vld [vmem:[%s1 + $0x270] sm:$0xff]
    %v98 = vld [vmem:[%s1 + $0x278] sm:$0xff]
    %v99 = vld [vmem:[%s1 + $0x280] sm:$0xff]
    %v100 = vld [vmem:[%s1 + $0x288] sm:$0xff]
    %v101 = vld [vmem:[%s1 + $0x290] sm:$0xff]
    %v102 = vld [vmem:[%s1 + $0x298] sm:$0xff]
    %v103 = vld [vmem:[%s1 + $0x2a0] sm:$0xff]
    %v104 = vld [vmem:[%s1 + $0x2a8] sm:$0xff]
    %v105 = vld [vmem:[%s1 + $0x2b0] sm:$0xff]
    %v106 = vld [vmem:[%s1 + $0x2b8] sm:$0xff]
    %v107 = vld [vmem:[%s1 + $0x2c0] sm:$0xff]
    %v108 = vld [vmem:[%s1 + $0x2c8] sm:$0xff]
    %v109 = vld [vmem:[%s1 + $0x2d0] sm:$0xff]
    %v110 = vld [vmem:[%s1 + $0x2d8] sm:$0xff]
    %v111 = vld [vmem:[%s1 + $0x2e0] sm:$0xff]
    %v112 = vld [vmem:[%s1 + $0x2e8] sm:$0xff]
    %v113 = vld [vmem:[%s1 + $0x2f0] sm:$0xff]
    %v114 = vld [vmem:[%s1 + $0x2f8] sm:$0xff]
    %v115 = vld [vmem:[%s1 + $0x300] sm:$0xff]
    %v116 = vld [vmem:[%s1 + $0x308] sm:$0xff]
    %v117 = vld [vmem:[%s1 + $0x310] sm:$0xff]
    %v118 = vld [vmem:[%s1 + $0x318] sm:$0xff]
    %v119 = vld [vmem:[%s1 + $0x320] sm:$0xff]
    %v120 = vld [vmem:[%s1 + $0x328] sm:$0xff]
    %v121 = vld [vmem:[%s1 + $0x330] sm:$0xff]
    %v122 = vld [vmem:[%s1 + $0x338] sm:$0xff]
    %v123 = vld [vmem:[%s1 + $0x340] sm:$0xff]
    %v124 = vld [vmem:[%s1 + $0x348] sm:$0xff]
    %v125 = vld [vmem:[%s1 + $0x350] sm:$0xff]
    %v126 = vld [vmem:[%s1 + $0x358] sm:$0xff]
    %v127 = vld [vmem:[%s1 + $0x360] sm:$0xff]
    %v128 = vld [vmem:[%s1 + $0x368] sm:$0xff]
    %v129 = vld [vmem:[%s1 + $0x370] sm:$0xff]
    %v130 = vld [vmem:[%s1 + $0x378] sm:$0xff]
    %v131 = vld [vmem:[%s1 + $0x380] sm:$0xff]
    %v132 = vld [vmem:[%s1 + $0x388] sm:$0xff]
    %v133 = vld [vmem:[%s1 + $0x390] sm:$0xff]
    %v134 = vld [vmem:[%s1 + $0x398] sm:$0xff]
    %v135 = vld [vmem:[%s1 + $0x3a0] sm:$0xff]
    %v136 = vld [vmem:[%s1 + $0x3a8] sm:$0xff]
    %v137 = vld [vmem:[%s1 + $0x3b0] sm:$0xff]
    %v138 = vld [vmem:[%s1 + $0x3b8] sm:$0xff]
    %v139 = vld [vmem:[%s1 + $0x3c0] sm:$0xff]
    %v140 = vld [vmem:[%s1 + $0x3c8] sm:$0xff]
    %v141 = vld [vmem:[%s1 + $0x3d0] sm:$0xff]
    %v142 = vld [vmem:[%s1 + $0x3d8] sm:$0xff]
    %v143 = vld [vmem:[%s1 + $0x3e0] sm:$0xff]
    %v144 = vld [vmem:[%s1 + $0x3e8] sm:$0xff]
    %v145 = vld [vmem:[%s1 + $0x3f0] sm:$0xff]
    %v146 = vld [vmem:[%s1 + $0x3f8] sm:$0xff]
    %v147 = vld [vmem:[%s1 + $0x400] sm:$0xff]
    %v148 = vld [vmem:[%s1 + $0x408] sm:$0xff]
    %v149 = vld [vmem:[%s1 + $0x410] sm:$0xff]
    %v150 = vld [vmem:[%s1 + $0x418] sm:$0xff]
    %v151 = vld [vmem:[%s1 + $0x420] sm:$0xff]
    %v152 = vld [vmem:[%s1 + $0x428] sm:$0xff]
    %v153 = vld [vmem:[%s1 + $0x430] sm:$0xff]
    %v154 = vld [vmem:[%s1 + $0x438] sm:$0xff]
    %v155 = vld [vmem:[%s1 + $0x440] sm:$0xff]
    %v156 = vld [vmem:[%s1 + $0x448] sm:$0xff]
    %v157 = vld [vmem:[%s1 + $0x450] sm:$0xff]
    %v158 = vld [vmem:[%s1 + $0x458] sm:$0xff]
    %v159 = vld [vmem:[%s1 + $0x460] sm:$0xff]
    %v160 = vld [vmem:[%s1 + $0x468] sm:$0xff]
    %v161 = vld [vmem:[%s1 + $0x470] sm:$0xff]
    %v162 = vld [vmem:[%s1 + $0x478] sm:$0xff]
    %v163 = vld [vmem:[%s1 + $0x480] sm:$0xff]
    %v164 = vld [vmem:[%s1 + $0x488] sm:$0xff]
    %v165 = vld [vmem:[%s1 + $0x490] sm:$0xff]
    %v166 = vld [vmem:[%s1 + $0x498] sm:$0xff]
    %v167 = vld [vmem:[%s1 + $0x4a0] sm:$0xff]
    %v168 = vld [vmem:[%s1 + $0x4a8] sm:$0xff]
    %v169 = vld [vmem:[%s1 + $0x4b0] sm:$0xff]
    %v170 = vld [vmem:[%s1 + $0x4b8] sm:$0xff]
    %v171 = vld [vmem:[%s1 + $0x4c0] sm:$0xff]
    %v172 = vld [vmem:[%s1 + $0x4c8] sm:$0xff]
    %v173 = vld [vmem:[%s1 + $0x4d0] sm:$0xff]
    %v174 = vld [vmem:[%s1 + $0x4d8] sm:$0xff]
    %v175 = vld [vmem:[%s1 + $0x4e0] sm:$0xff]
    %v176 = vld [vmem:[%s1 + $0x4e8] sm:$0xff]
    %v177 = vld [vmem:[%s1 + $0x4f0] sm:$0xff]
    %v178 = vld [vmem:[%s1 + $0x4f8] sm:$0xff]
    %v179 = vld [vmem:[%s1 + $0x500] sm:$0xff]
    %v180 = vld [vmem:[%s1 + $0x508] sm:$0xff]
    %v181 = vld [vmem:[%s1 + $0x510] sm:$0xff]
    %v182 = vld [vmem:[%s1 + $0x518] sm:$0xff]
    %v183 = vld [vmem:[%s1 + $0x520] sm:$0xff]
    %v184 = vld [vmem:[%s1 + $0x528] sm:$0xff]
    %v185 = vld [vmem:[%s1 + $0x530] sm:$0xff]
    %v186 = vld [vmem:[%s1 + $0x538] sm:$0xff]
    %v187 = vld [vmem:[%s1 + $0x540] sm:$0xff]
    %v188 = vld [vmem:[%s1 + $0x548] sm:$0xff]
    %v189 = vld [vmem:[%s1 + $0x550] sm:$0xff]
    %v190 = vld [vmem:[%s1 + $0x558] sm:$0xff]
    %v191 = vld [vmem:[%s1 + $0x560] sm:$0xff]
    %v192 = vld [vmem:[%s1 + $0x568] sm:$0xff]
    %v193 = vld [vmem:[%s1 + $0x570] sm:$0xff]
    %v194 = vld [vmem:[%s1 + $0x578] sm:$0xff]
    %v195 = vld [vmem:[%s1 + $0x580] sm:$0xff]
    %v196 = vld [vmem:[%s1 + $0x588] sm:$0xff]
    %v197 = vld [vmem:[%s1 + $0x590] sm:$0xff]
    %v198 = vld [vmem:[%s1 + $0x598] sm:$0xff]
    %v199 = vld [vmem:[%s1 + $0x5a0] sm:$0xff]
    %v200 = vld [vmem:[%s1 + $0x5a8] sm:$0xff]
    %v201 = vld [vmem:[%s1 + $0x5b0] sm:$0xff]
    %v202 = vld [vmem:[%s1 + $0x5b8] sm:$0xff]
    %v203 = vld [vmem:[%s1 + $0x5c0] sm:$0xff]
    %v204 = vld [vmem:[%s1 + $0x5c8] sm:$0xff]
    %v205 = vld [vmem:[%s1 + $0x5d0] sm:$0xff]
    %v206 = vld [vmem:[%s1 + $0x5d8] sm:$0xff]
    %v207 = vld [vmem:[%s1 + $0x5e0] sm:$0xff]
    %v208 = vld [vmem:[%s1 + $0x5e8] sm:$0xff]
    %v209 = vld [vmem:[%s1 + $0x5f0] sm:$0xff]
    %v210 = vld [vmem:[%s1 + $0x5f8] sm:$0xff]
    %v211 = vld [vmem:[%s1 + $0x600] sm:$0xff]
    %v212 = vld [vmem:[%s1 + $0x608] sm:$0xff]
    %v213 = vld [vmem:[%s1 + $0x610] sm:$0xff]
    %v214 = vld [vmem:[%s1 + $0x618] sm:$0xff]
    %v215 = vld [vmem:[%s1 + $0x620] sm:$0xff]
    %v216 = vld [vmem:[%s1 + $0x628] sm:$0xff]
    %v217 = vld [vmem:[%s1 + $0x630] sm:$0xff]
    %v218 = vld [vmem:[%s1 + $0x638] sm:$0xff]
    %v219 = vld [vmem:[%s1 + $0x640] sm:$0xff]
    %v220 = vld [vmem:[%s1 + $0x648] sm:$0xff]
    %v221 = vld [vmem:[%s1 + $0x650] sm:$0xff]
    %v222 = vld [vmem:[%s1 + $0x658] sm:$0xff]
    %v223 = vld [vmem:[%s1 + $0x660] sm:$0xff]
    %v224 = vld [vmem:[%s1 + $0x668] sm:$0xff]
    %v225 = vld [vmem:[%s1 + $0x670] sm:$0xff]
    %v226 = vld [vmem:[%s1 + $0x678] sm:$0xff]
    %v227 = vld [vmem:[%s1 + $0x680] sm:$0xff]
    %v228 = vld [vmem:[%s1 + $0x688] sm:$0xff]
    %v229 = vld [vmem:[%s1 + $0x690] sm:$0xff]
    %v230 = vld [vmem:[%s1 + $0x698] sm:$0xff]
    %v231 = vld [vmem:[%s1 + $0x6a0] sm:$0xff]
    %v232 = vld [vmem:[%s1 + $0x6a8] sm:$0xff]
    %v233 = vld [vmem:[%s1 + $0x6b0] sm:$0xff]
    %v234 = vld [vmem:[%s1 + $0x6b8] sm:$0xff]
    %v235 = vld [vmem:[%s1 + $0x6c0] sm:$0xff]
    %v236 = vld [vmem:[%s1 + $0x6c8] sm:$0xff]
    %v237 = vld [vmem:[%s1 + $0x6d0] sm:$0xff]
    %v238 = vld [vmem:[%s1 + $0x6d8] sm:$0xff]
    %v239 = vld [vmem:[%s1 + $0x6e0] sm:$0xff]
    %v240 = vld [vmem:[%s1 + $0x6e8] sm:$0xff]
    %v241 = vld [vmem:[%s1 + $0x6f0] sm:$0xff]
    %v242 = vld [vmem:[%s1 + $0x6f8] sm:$0xff]
    %v243 = vld [vmem:[%s1 + $0x700] sm:$0xff]
    %v244 = vld [vmem:[%s1 + $0x708] sm:$0xff]
    %v245 = vld [vmem:[%s1 + $0x710] sm:$0xff]
    %v246 = vld [vmem:[%s1 + $0x718] sm:$0xff]
    %v247 = vld [vmem:[%s1 + $0x720] sm:$0xff]
    %v248 = vld [vmem:[%s1 + $0x728] sm:$0xff]
    %v249 = vld [vmem:[%s1 + $0x730] sm:$0xff]
    %v250 = vld [vmem:[%s1 + $0x738] sm:$0xff]
    %v251 = vld [vmem:[%s1 + $0x740] sm:$0xff]
    %v252 = vld [vmem:[%s1 + $0x748] sm:$0xff]
    %v253 = vld [vmem:[%s1 + $0x750] sm:$0xff]
    %v254 = vld [vmem:[%s1 + $0x758] sm:$0xff]
    %v255 = vld [vmem:[%s1 + $0x760] sm:$0xff]
    %v256 = vld [vmem:[%s1 + $0x768] sm:$0xff]
    %v257 = vld [vmem:[%s1 + $0x770] sm:$0xff]
    %v258 = vld [vmem:[%s1 + $0x778] sm:$0xff]
    %v259 = vld [vmem:[%s1 + $0x780] sm:$0xff]
    %v260 = vld [vmem:[%s1 + $0x788] sm:$0xff]
    %v261 = vld [vmem:[%s1 + $0x790] sm:$0xff]
    %v262 = vld [vmem:[%s1 + $0x798] sm:$0xff]
    %v263 = vld [vmem:[%s1 + $0x7a0] sm:$0xff]
    %v264 = vld [vmem:[%s1 + $0x7a8] sm:$0xff]
    %v265 = vld [vmem:[%s1 + $0x7b0] sm:$0xff]
    %v266 = vld [vmem:[%s1 + $0x7b8] sm:$0xff]
    %v267 = vld [vmem:[%s1 + $0x7c0] sm:$0xff]
    %v268 = vld [vmem:[%s1 + $0x7c8] sm:$0xff]
    %v269 = vld [vmem:[%s1 + $0x7d0] sm:$0xff]
    %v270 = vld [vmem:[%s1 + $0x7d8] sm:$0xff]
    %v271 = vld [vmem:[%s1 + $0x7e0] sm:$0xff]
    %v272 = vld [vmem:[%s1 + $0x7e8] sm:$0xff]
    %v273 = vld [vmem:[%s1 + $0x7f0] sm:$0xff]
    %v274 = vld [vmem:[%s1 + $0x7f8] sm:$0xff]
    %v275 = vld [vmem:[%s2] sm:$0x1]
    %v277 = vlaneseq
    %v278 = vshrl.u32 %v277, 7
    %v279 = vsub.s32 0, %v278
    %v280 = vrot.slane %v275, %v279
    %v286 = vcombine.high %v15, %v15
    %v288 = vunpack.c.l.s4 1983009808
    %v289 = vunpack.c.0.s8 %v288
    %v290 = vlaneseq
    %v291 = vshrl.u32 %v290, 7
    %v292 = vsub.s32 %v289, %v291
    %v293 = vrot.slane %v15, %v292
    %v295 = vunpack.c.l.s4 1983009808
    %v296 = vunpack.c.0.s8 %v295
    %v297 = vlaneseq
    %v298 = vshrl.u32 %v297, 7
    %v299 = vsub.s32 %v296, %v298
    %v300 = vrot.slane %v286, %v299
    %v301 = vcombine.high %v293, %v293
    %v302 = vcombine.high %v300, %v300
    %v303 = vcombine.high %v16, %v16
    %v305 = vunpack.c.l.s4 1983009808
    %v306 = vunpack.c.0.s8 %v305
    %v307 = vlaneseq
    %v308 = vshrl.u32 %v307, 7
    %v309 = vsub.s32 %v306, %v308
    %v310 = vrot.slane %v16, %v309
    %v312 = vunpack.c.l.s4 1983009808
    %v313 = vunpack.c.0.s8 %v312
    %v314 = vlaneseq
    %v315 = vshrl.u32 %v314, 7
    %v316 = vsub.s32 %v313, %v315
    %v317 = vrot.slane %v303, %v316
    %v318 = vcombine.high %v310, %v310
    %v319 = vcombine.high %v317, %v317
    %v320 = vcombine.high %v17, %v17
    %v322 = vunpack.c.l.s4 1983009808
    %v323 = vunpack.c.0.s8 %v322
    %v324 = vlaneseq
    %v325 = vshrl.u32 %v324, 7
    %v326 = vsub.s32 %v323, %v325
    %v327 = vrot.slane %v17, %v326
    %v329 = vunpack.c.l.s4 1983009808
    %v330 = vunpack.c.0.s8 %v329
    %v331 = vlaneseq
    %v332 = vshrl.u32 %v331, 7
    %v333 = vsub.s32 %v330, %v332
    %v334 = vrot.slane %v320, %v333
    %v335 = vcombine.high %v327, %v327
    %v336 = vcombine.high %v334, %v334
    %v337 = vcombine.high %v18, %v18
    %v339 = vunpack.c.l.s4 1983009808
    %v340 = vunpack.c.0.s8 %v339
    %v341 = vlaneseq
    %v342 = vshrl.u32 %v341, 7
    %v343 = vsub.s32 %v340, %v342
    %v344 = vrot.slane %v18, %v343
    %v346 = vunpack.c.l.s4 1983009808
    %v347 = vunpack.c.0.s8 %v346
    %v348 = vlaneseq
    %v349 = vshrl.u32 %v348, 7
    %v350 = vsub.s32 %v347, %v349
    %v351 = vrot.slane %v337, %v350
    %v352 = vcombine.high %v344, %v344
    %v353 = vcombine.high %v351, %v351
    %370 = vmatprep.subr.mxu0 %v20
    %371 = vmatpush1.xpose.msra.mxu0 %v19
    %372 = vmatprep.subr.mxu0 %v36
    %373 = vmatpush1.xpose.msra.mxu0 %v35
    %374 = vmatprep.subr.mxu0 %v52
    %375 = vmatpush1.xpose.msra.mxu0 %v51
    %376 = vmatprep.subr.mxu0 %v68
    %377 = vmatpush1.xpose.msra.mxu0 %v67
    %378 = vmatprep.subr.mxu0 %v84
    %379 = vmatpush1.xpose.msra.mxu0 %v83
    %380 = vmatprep.subr.mxu0 %v100
    %381 = vmatpush1.xpose.msra.mxu0 %v99
    %382 = vmatprep.subr.mxu0 %v116
    %383 = vmatpush1.xpose.msra.mxu0 %v115
    %384 = vmatprep.subr.mxu0 %v132
    %385 = vmatpush1.xpose.msra.mxu0 %v131
    %386 = vmatprep.subr.mxu0 %v148
    %387 = vmatpush1.xpose.msra.mxu0 %v147
    %388 = vmatprep.subr.mxu0 %v164
    %389 = vmatpush1.xpose.msra.mxu0 %v163
    %390 = vmatprep.subr.mxu0 %v180
    %391 = vmatpush1.xpose.msra.mxu0 %v179
    %392 = vmatprep.subr.mxu0 %v196
    %393 = vmatpush1.xpose.msra.mxu0 %v195
    %394 = vmatprep.subr.mxu0 %v212
    %395 = vmatpush1.xpose.msra.mxu0 %v211
    %396 = vmatprep.subr.mxu0 %v228
    %397 = vmatpush1.xpose.msra.mxu0 %v227
    %398 = vmatprep.subr.mxu0 %v244
    %399 = vmatpush1.xpose.msra.mxu0 %v243
    %400 = vmatprep.subr.mxu0 %v260
    %401 = vmatpush1.xpose.msra.mxu0 %v259
    %402 = vmatprep.subr.mxu0 0.0
    %403 = vmatpush1.xpose.msra.mxu0 0.0
    %404 = vmatprep.subr.mxu0 0.0
    %405 = vmatpush1.xpose.msra.mxu0 0.0
    %406 = vmatprep.subr.mxu0 0.0
    %407 = vmatpush1.xpose.msra.mxu0 0.0
    %408 = vmatprep.subr.mxu0 0.0
    %409 = vmatpush1.xpose.msra.mxu0 0.0
    %410 = vmatprep.subr.mxu0 0.0
    %411 = vmatpush1.xpose.msra.mxu0 0.0
    %412 = vmatprep.subr.mxu0 0.0
    %413 = vmatpush1.xpose.msra.mxu0 0.0
    %414 = vmatprep.subr.mxu0 0.0
    %415 = vmatpush1.xpose.msra.mxu0 0.0
    %416 = vmatprep.subr.mxu0 0.0
    %417 = vmatpush1.xpose.msra.mxu0 0.0
    %418 = vmatprep.subr.mxu0 0.0
    %419 = vmatpush1.xpose.msra.mxu0 0.0
    %420 = vmatprep.subr.mxu0 0.0
    %421 = vmatpush1.xpose.msra.mxu0 0.0
    %422 = vmatprep.subr.mxu0 0.0
    %423 = vmatpush1.xpose.msra.mxu0 0.0
    %424 = vmatprep.subr.mxu0 0.0
    %425 = vmatpush1.xpose.msra.mxu0 0.0
    %426 = vmatprep.subr.mxu0 0.0
    %427 = vmatpush1.xpose.msra.mxu0 0.0
    %428 = vmatprep.subr.mxu0 0.0
    %429 = vmatpush1.xpose.msra.mxu0 0.0
    %430 = vmatprep.subr.mxu0 0.0
    %431 = vmatpush1.xpose.msra.mxu0 0.0
    %432 = vmatprep.subr.mxu0 0.0
    %433 = vmatpush1.xpose.msra.mxu0 0.0
    %434 = vmatprep.mubr.f32.mxu0 %v301
    %435 = vmatmul.mubr.f32.gmra.mrb[0].mxu0 %v293
    %v436 = vpop.f32.mrb[0].mxu0
    %v437 = vadd.f32 %v280, %v436
    %v438 = vpop.f32.mrb[0].mxu0
    %439 = vdwg.mxu0
    %440 = vmatprep.subr.mxu0 %v22
    %441 = vmatpush1.xpose.msra.mxu0 %v21
    %442 = vmatprep.subr.mxu0 %v38
    %443 = vmatpush1.xpose.msra.mxu0 %v37
    %444 = vmatprep.subr.mxu0 %v54
    %445 = vmatpush1.xpose.msra.mxu0 %v53
    %446 = vmatprep.subr.mxu0 %v70
    %447 = vmatpush1.xpose.msra.mxu0 %v69
    %448 = vmatprep.subr.mxu0 %v86
    %449 = vmatpush1.xpose.msra.mxu0 %v85
    %450 = vmatprep.subr.mxu0 %v102
    %451 = vmatpush1.xpose.msra.mxu0 %v101
    %452 = vmatprep.subr.mxu0 %v118
    %453 = vmatpush1.xpose.msra.mxu0 %v117
    %454 = vmatprep.subr.mxu0 %v134
    %455 = vmatpush1.xpose.msra.mxu0 %v133
    %456 = vmatprep.subr.mxu0 %v150
    %457 = vmatpush1.xpose.msra.mxu0 %v149
    %458 = vmatprep.subr.mxu0 %v166
    %459 = vmatpush1.xpose.msra.mxu0 %v165
    %460 = vmatprep.subr.mxu0 %v182
    %461 = vmatpush1.xpose.msra.mxu0 %v181
    %462 = vmatprep.subr.mxu0 %v198
    %463 = vmatpush1.xpose.msra.mxu0 %v197
    %464 = vmatprep.subr.mxu0 %v214
    %465 = vmatpush1.xpose.msra.mxu0 %v213
    %466 = vmatprep.subr.mxu0 %v230
    %467 = vmatpush1.xpose.msra.mxu0 %v229
    %468 = vmatprep.subr.mxu0 %v246
    %469 = vmatpush1.xpose.msra.mxu0 %v245
    %470 = vmatprep.subr.mxu0 %v262
    %471 = vmatpush1.xpose.msra.mxu0 %v261
    %472 = vmatprep.subr.mxu0 0.0
    %473 = vmatpush1.xpose.msra.mxu0 0.0
    %474 = vmatprep.subr.mxu0 0.0
    %475 = vmatpush1.xpose.msra.mxu0 0.0
    %476 = vmatprep.subr.mxu0 0.0
    %477 = vmatpush1.xpose.msra.mxu0 0.0
    %478 = vmatprep.subr.mxu0 0.0
    %479 = vmatpush1.xpose.msra.mxu0 0.0
    %480 = vmatprep.subr.mxu0 0.0
    %481 = vmatpush1.xpose.msra.mxu0 0.0
    %482 = vmatprep.subr.mxu0 0.0
    %483 = vmatpush1.xpose.msra.mxu0 0.0
    %484 = vmatprep.subr.mxu0 0.0
    %485 = vmatpush1.xpose.msra.mxu0 0.0
    %486 = vmatprep.subr.mxu0 0.0
    %487 = vmatpush1.xpose.msra.mxu0 0.0
    %488 = vmatprep.subr.mxu0 0.0
    %489 = vmatpush1.xpose.msra.mxu0 0.0
    %490 = vmatprep.subr.mxu0 0.0
    %491 = vmatpush1.xpose.msra.mxu0 0.0
    %492 = vmatprep.subr.mxu0 0.0
    %493 = vmatpush1.xpose.msra.mxu0 0.0
    %494 = vmatprep.subr.mxu0 0.0
    %495 = vmatpush1.xpose.msra.mxu0 0.0
    %496 = vmatprep.subr.mxu0 0.0
    %497 = vmatpush1.xpose.msra.mxu0 0.0
    %498 = vmatprep.subr.mxu0 0.0
    %499 = vmatpush1.xpose.msra.mxu0 0.0
    %500 = vmatprep.subr.mxu0 0.0
    %501 = vmatpush1.xpose.msra.mxu0 0.0
    %502 = vmatprep.subr.mxu0 0.0
    %503 = vmatpush1.xpose.msra.mxu0 0.0
    %504 = vmatprep.mubr.f32.mxu0 %v302
    %505 = vmatmul.mubr.f32.gmra.mrb[0].mxu0 %v300
    %v506 = vpop.f32.mrb[0].mxu0
    %v507 = vadd.f32 %v437, %v506
    %v508 = vpop.f32.mrb[0].mxu0
    %509 = vdwg.mxu0
    %510 = vmatprep.subr.mxu0 %v24
    %511 = vmatpush1.xpose.msra.mxu0 %v23
    %512 = vmatprep.subr.mxu0 %v40
    %513 = vmatpush1.xpose.msra.mxu0 %v39
    %514 = vmatprep.subr.mxu0 %v56
    %515 = vmatpush1.xpose.msra.mxu0 %v55
    %516 = vmatprep.subr.mxu0 %v72
    %517 = vmatpush1.xpose.msra.mxu0 %v71
    %518 = vmatprep.subr.mxu0 %v88
    %519 = vmatpush1.xpose.msra.mxu0 %v87
    %520 = vmatprep.subr.mxu0 %v104
    %521 = vmatpush1.xpose.msra.mxu0 %v103
    %522 = vmatprep.subr.mxu0 %v120
    %523 = vmatpush1.xpose.msra.mxu0 %v119
    %524 = vmatprep.subr.mxu0 %v136
    %525 = vmatpush1.xpose.msra.mxu0 %v135
    %526 = vmatprep.subr.mxu0 %v152
    %527 = vmatpush1.xpose.msra.mxu0 %v151
    %528 = vmatprep.subr.mxu0 %v168
    %529 = vmatpush1.xpose.msra.mxu0 %v167
    %530 = vmatprep.subr.mxu0 %v184
    %531 = vmatpush1.xpose.msra.mxu0 %v183
    %532 = vmatprep.subr.mxu0 %v200
    %533 = vmatpush1.xpose.msra.mxu0 %v199
    %534 = vmatprep.subr.mxu0 %v216
    %535 = vmatpush1.xpose.msra.mxu0 %v215
    %536 = vmatprep.subr.mxu0 %v232
    %537 = vmatpush1.xpose.msra.mxu0 %v231
    %538 = vmatprep.subr.mxu0 %v248
    %539 = vmatpush1.xpose.msra.mxu0 %v247
    %540 = vmatprep.subr.mxu0 %v264
    %541 = vmatpush1.xpose.msra.mxu0 %v263
    %542 = vmatprep.subr.mxu0 0.0
    %543 = vmatpush1.xpose.msra.mxu0 0.0
    %544 = vmatprep.subr.mxu0 0.0
    %545 = vmatpush1.xpose.msra.mxu0 0.0
    %546 = vmatprep.subr.mxu0 0.0
    %547 = vmatpush1.xpose.msra.mxu0 0.0
    %548 = vmatprep.subr.mxu0 0.0
    %549 = vmatpush1.xpose.msra.mxu0 0.0
    %550 = vmatprep.subr.mxu0 0.0
    %551 = vmatpush1.xpose.msra.mxu0 0.0
    %552 = vmatprep.subr.mxu0 0.0
    %553 = vmatpush1.xpose.msra.mxu0 0.0
    %554 = vmatprep.subr.mxu0 0.0
    %555 = vmatpush1.xpose.msra.mxu0 0.0
    %556 = vmatprep.subr.mxu0 0.0
    %557 = vmatpush1.xpose.msra.mxu0 0.0
    %558 = vmatprep.subr.mxu0 0.0
    %559 = vmatpush1.xpose.msra.mxu0 0.0
    %560 = vmatprep.subr.mxu0 0.0
    %561 = vmatpush1.xpose.msra.mxu0 0.0
    %562 = vmatprep.subr.mxu0 0.0
    %563 = vmatpush1.xpose.msra.mxu0 0.0
    %564 = vmatprep.subr.mxu0 0.0
    %565 = vmatpush1.xpose.msra.mxu0 0.0
    %566 = vmatprep.subr.mxu0 0.0
    %567 = vmatpush1.xpose.msra.mxu0 0.0
    %568 = vmatprep.subr.mxu0 0.0
    %569 = vmatpush1.xpose.msra.mxu0 0.0
    %570 = vmatprep.subr.mxu0 0.0
    %571 = vmatpush1.xpose.msra.mxu0 0.0
    %572 = vmatprep.subr.mxu0 0.0
    %573 = vmatpush1.xpose.msra.mxu0 0.0
    %574 = vmatprep.mubr.f32.mxu0 %v318
    %575 = vmatmul.mubr.f32.gmra.mrb[0].mxu0 %v310
    %v576 = vpop.f32.mrb[0].mxu0
    %v577 = vadd.f32 %v507, %v576
    %v578 = vpop.f32.mrb[0].mxu0
    %579 = vdwg.mxu0
    %580 = vmatprep.subr.mxu0 %v26
    %581 = vmatpush1.xpose.msra.mxu0 %v25
    %582 = vmatprep.subr.mxu0 %v42
    %583 = vmatpush1.xpose.msra.mxu0 %v41
    %584 = vmatprep.subr.mxu0 %v58
    %585 = vmatpush1.xpose.msra.mxu0 %v57
    %586 = vmatprep.subr.mxu0 %v74
    %587 = vmatpush1.xpose.msra.mxu0 %v73
    %588 = vmatprep.subr.mxu0 %v90
    %589 = vmatpush1.xpose.msra.mxu0 %v89
    %590 = vmatprep.subr.mxu0 %v106
    %591 = vmatpush1.xpose.msra.mxu0 %v105
    %592 = vmatprep.subr.mxu0 %v122
    %593 = vmatpush1.xpose.msra.mxu0 %v121
    %594 = vmatprep.subr.mxu0 %v138
    %595 = vmatpush1.xpose.msra.mxu0 %v137
    %596 = vmatprep.subr.mxu0 %v154
    %597 = vmatpush1.xpose.msra.mxu0 %v153
    %598 = vmatprep.subr.mxu0 %v170
    %599 = vmatpush1.xpose.msra.mxu0 %v169
    %600 = vmatprep.subr.mxu0 %v186
    %601 = vmatpush1.xpose.msra.mxu0 %v185
    %602 = vmatprep.subr.mxu0 %v202
    %603 = vmatpush1.xpose.msra.mxu0 %v201
    %604 = vmatprep.subr.mxu0 %v218
    %605 = vmatpush1.xpose.msra.mxu0 %v217
    %606 = vmatprep.subr.mxu0 %v234
    %607 = vmatpush1.xpose.msra.mxu0 %v233
    %608 = vmatprep.subr.mxu0 %v250
    %609 = vmatpush1.xpose.msra.mxu0 %v249
    %610 = vmatprep.subr.mxu0 %v266
    %611 = vmatpush1.xpose.msra.mxu0 %v265
    %612 = vmatprep.subr.mxu0 0.0
    %613 = vmatpush1.xpose.msra.mxu0 0.0
    %614 = vmatprep.subr.mxu0 0.0
    %615 = vmatpush1.xpose.msra.mxu0 0.0
    %616 = vmatprep.subr.mxu0 0.0
    %617 = vmatpush1.xpose.msra.mxu0 0.0
    %618 = vmatprep.subr.mxu0 0.0
    %619 = vmatpush1.xpose.msra.mxu0 0.0
    %620 = vmatprep.subr.mxu0 0.0
    %621 = vmatpush1.xpose.msra.mxu0 0.0
    %622 = vmatprep.subr.mxu0 0.0
    %623 = vmatpush1.xpose.msra.mxu0 0.0
    %624 = vmatprep.subr.mxu0 0.0
    %625 = vmatpush1.xpose.msra.mxu0 0.0
    %626 = vmatprep.subr.mxu0 0.0
    %627 = vmatpush1.xpose.msra.mxu0 0.0
    %628 = vmatprep.subr.mxu0 0.0
    %629 = vmatpush1.xpose.msra.mxu0 0.0
    %630 = vmatprep.subr.mxu0 0.0
    %631 = vmatpush1.xpose.msra.mxu0 0.0
    %632 = vmatprep.subr.mxu0 0.0
    %633 = vmatpush1.xpose.msra.mxu0 0.0
    %634 = vmatprep.subr.mxu0 0.0
    %635 = vmatpush1.xpose.msra.mxu0 0.0
    %636 = vmatprep.subr.mxu0 0.0
    %637 = vmatpush1.xpose.msra.mxu0 0.0
    %638 = vmatprep.subr.mxu0 0.0
    %639 = vmatpush1.xpose.msra.mxu0 0.0
    %640 = vmatprep.subr.mxu0 0.0
    %641 = vmatpush1.xpose.msra.mxu0 0.0
    %642 = vmatprep.subr.mxu0 0.0
    %643 = vmatpush1.xpose.msra.mxu0 0.0
    %644 = vmatprep.mubr.f32.mxu0 %v319
    %645 = vmatmul.mubr.f32.gmra.mrb[0].mxu0 %v317
    %v646 = vpop.f32.mrb[0].mxu0
    %v647 = vadd.f32 %v577, %v646
    %v648 = vpop.f32.mrb[0].mxu0
    %649 = vdwg.mxu0
    %650 = vmatprep.subr.mxu0 %v28
    %651 = vmatpush1.xpose.msra.mxu0 %v27
    %652 = vmatprep.subr.mxu0 %v44
    %653 = vmatpush1.xpose.msra.mxu0 %v43
    %654 = vmatprep.subr.mxu0 %v60
    %655 = vmatpush1.xpose.msra.mxu0 %v59
    %656 = vmatprep.subr.mxu0 %v76
    %657 = vmatpush1.xpose.msra.mxu0 %v75
    %658 = vmatprep.subr.mxu0 %v92
    %659 = vmatpush1.xpose.msra.mxu0 %v91
    %660 = vmatprep.subr.mxu0 %v108
    %661 = vmatpush1.xpose.msra.mxu0 %v107
    %662 = vmatprep.subr.mxu0 %v124
    %663 = vmatpush1.xpose.msra.mxu0 %v123
    %664 = vmatprep.subr.mxu0 %v140
    %665 = vmatpush1.xpose.msra.mxu0 %v139
    %666 = vmatprep.subr.mxu0 %v156
    %667 = vmatpush1.xpose.msra.mxu0 %v155
    %668 = vmatprep.subr.mxu0 %v172
    %669 = vmatpush1.xpose.msra.mxu0 %v171
    %670 = vmatprep.subr.mxu0 %v188
    %671 = vmatpush1.xpose.msra.mxu0 %v187
    %672 = vmatprep.subr.mxu0 %v204
    %673 = vmatpush1.xpose.msra.mxu0 %v203
    %674 = vmatprep.subr.mxu0 %v220
    %675 = vmatpush1.xpose.msra.mxu0 %v219
    %676 = vmatprep.subr.mxu0 %v236
    %677 = vmatpush1.xpose.msra.mxu0 %v235
    %678 = vmatprep.subr.mxu0 %v252
    %679 = vmatpush1.xpose.msra.mxu0 %v251
    %680 = vmatprep.subr.mxu0 %v268
    %681 = vmatpush1.xpose.msra.mxu0 %v267
    %682 = vmatprep.subr.mxu0 0.0
    %683 = vmatpush1.xpose.msra.mxu0 0.0
    %684 = vmatprep.subr.mxu0 0.0
    %685 = vmatpush1.xpose.msra.mxu0 0.0
    %686 = vmatprep.subr.mxu0 0.0
    %687 = vmatpush1.xpose.msra.mxu0 0.0
    %688 = vmatprep.subr.mxu0 0.0
    %689 = vmatpush1.xpose.msra.mxu0 0.0
    %690 = vmatprep.subr.mxu0 0.0
    %691 = vmatpush1.xpose.msra.mxu0 0.0
    %692 = vmatprep.subr.mxu0 0.0
    %693 = vmatpush1.xpose.msra.mxu0 0.0
    %694 = vmatprep.subr.mxu0 0.0
    %695 = vmatpush1.xpose.msra.mxu0 0.0
    %696 = vmatprep.subr.mxu0 0.0
    %697 = vmatpush1.xpose.msra.mxu0 0.0
    %698 = vmatprep.subr.mxu0 0.0
    %699 = vmatpush1.xpose.msra.mxu0 0.0
    %700 = vmatprep.subr.mxu0 0.0
    %701 = vmatpush1.xpose.msra.mxu0 0.0
    %702 = vmatprep.subr.mxu0 0.0
    %703 = vmatpush1.xpose.msra.mxu0 0.0
    %704 = vmatprep.subr.mxu0 0.0
    %705 = vmatpush1.xpose.msra.mxu0 0.0
    %706 = vmatprep.subr.mxu0 0.0
    %707 = vmatpush1.xpose.msra.mxu0 0.0
    %708 = vmatprep.subr.mxu0 0.0
    %709 = vmatpush1.xpose.msra.mxu0 0.0
    %710 = vmatprep.subr.mxu0 0.0
    %711 = vmatpush1.xpose.msra.mxu0 0.0
    %712 = vmatprep.subr.mxu0 0.0
    %713 = vmatpush1.xpose.msra.mxu0 0.0
    %714 = vmatprep.mubr.f32.mxu0 %v335
    %715 = vmatmul.mubr.f32.gmra.mrb[0].mxu0 %v327
    %v716 = vpop.f32.mrb[0].mxu0
    %v717 = vadd.f32 %v647, %v716
    %v718 = vpop.f32.mrb[0].mxu0
    %719 = vdwg.mxu0
    %720 = vmatprep.subr.mxu0 %v30
    %721 = vmatpush1.xpose.msra.mxu0 %v29
    %722 = vmatprep.subr.mxu0 %v46
    %723 = vmatpush1.xpose.msra.mxu0 %v45
    %724 = vmatprep.subr.mxu0 %v62
    %725 = vmatpush1.xpose.msra.mxu0 %v61
    %726 = vmatprep.subr.mxu0 %v78
    %727 = vmatpush1.xpose.msra.mxu0 %v77
    %728 = vmatprep.subr.mxu0 %v94
    %729 = vmatpush1.xpose.msra.mxu0 %v93
    %730 = vmatprep.subr.mxu0 %v110
    %731 = vmatpush1.xpose.msra.mxu0 %v109
    %732 = vmatprep.subr.mxu0 %v126
    %733 = vmatpush1.xpose.msra.mxu0 %v125
    %734 = vmatprep.subr.mxu0 %v142
    %735 = vmatpush1.xpose.msra.mxu0 %v141
    %736 = vmatprep.subr.mxu0 %v158
    %737 = vmatpush1.xpose.msra.mxu0 %v157
    %738 = vmatprep.subr.mxu0 %v174
    %739 = vmatpush1.xpose.msra.mxu0 %v173
    %740 = vmatprep.subr.mxu0 %v190
    %741 = vmatpush1.xpose.msra.mxu0 %v189
    %742 = vmatprep.subr.mxu0 %v206
    %743 = vmatpush1.xpose.msra.mxu0 %v205
    %744 = vmatprep.subr.mxu0 %v222
    %745 = vmatpush1.xpose.msra.mxu0 %v221
    %746 = vmatprep.subr.mxu0 %v238
    %747 = vmatpush1.xpose.msra.mxu0 %v237
    %748 = vmatprep.subr.mxu0 %v254
    %749 = vmatpush1.xpose.msra.mxu0 %v253
    %750 = vmatprep.subr.mxu0 %v270
    %751 = vmatpush1.xpose.msra.mxu0 %v269
    %752 = vmatprep.subr.mxu0 0.0
    %753 = vmatpush1.xpose.msra.mxu0 0.0
    %754 = vmatprep.subr.mxu0 0.0
    %755 = vmatpush1.xpose.msra.mxu0 0.0
    %756 = vmatprep.subr.mxu0 0.0
    %757 = vmatpush1.xpose.msra.mxu0 0.0
    %758 = vmatprep.subr.mxu0 0.0
    %759 = vmatpush1.xpose.msra.mxu0 0.0
    %760 = vmatprep.subr.mxu0 0.0
    %761 = vmatpush1.xpose.msra.mxu0 0.0
    %762 = vmatprep.subr.mxu0 0.0
    %763 = vmatpush1.xpose.msra.mxu0 0.0
    %764 = vmatprep.subr.mxu0 0.0
    %765 = vmatpush1.xpose.msra.mxu0 0.0
    %766 = vmatprep.subr.mxu0 0.0
    %767 = vmatpush1.xpose.msra.mxu0 0.0
    %768 = vmatprep.subr.mxu0 0.0
    %769 = vmatpush1.xpose.msra.mxu0 0.0
    %770 = vmatprep.subr.mxu0 0.0
    %771 = vmatpush1.xpose.msra.mxu0 0.0
    %772 = vmatprep.subr.mxu0 0.0
    %773 = vmatpush1.xpose.msra.mxu0 0.0
    %774 = vmatprep.subr.mxu0 0.0
    %775 = vmatpush1.xpose.msra.mxu0 0.0
    %776 = vmatprep.subr.mxu0 0.0
    %777 = vmatpush1.xpose.msra.mxu0 0.0
    %778 = vmatprep.subr.mxu0 0.0
    %779 = vmatpush1.xpose.msra.mxu0 0.0
    %780 = vmatprep.subr.mxu0 0.0
    %781 = vmatpush1.xpose.msra.mxu0 0.0
    %782 = vmatprep.subr.mxu0 0.0
    %783 = vmatpush1.xpose.msra.mxu0 0.0
    %784 = vmatprep.mubr.f32.mxu0 %v336
    %785 = vmatmul.mubr.f32.gmra.mrb[0].mxu0 %v334
    %v786 = vpop.f32.mrb[0].mxu0
    %v787 = vadd.f32 %v717, %v786
    %v788 = vpop.f32.mrb[0].mxu0
    %789 = vdwg.mxu0
    %790 = vmatprep.subr.mxu0 %v32
    %791 = vmatpush1.xpose.msra.mxu0 %v31
    %792 = vmatprep.subr.mxu0 %v48
    %793 = vmatpush1.xpose.msra.mxu0 %v47
    %794 = vmatprep.subr.mxu0 %v64
    %795 = vmatpush1.xpose.msra.mxu0 %v63
    %796 = vmatprep.subr.mxu0 %v80
    %797 = vmatpush1.xpose.msra.mxu0 %v79
    %798 = vmatprep.subr.mxu0 %v96
    %799 = vmatpush1.xpose.msra.mxu0 %v95
    %800 = vmatprep.subr.mxu0 %v112
    %801 = vmatpush1.xpose.msra.mxu0 %v111
    %802 = vmatprep.subr.mxu0 %v128
    %803 = vmatpush1.xpose.msra.mxu0 %v127
    %804 = vmatprep.subr.mxu0 %v144
    %805 = vmatpush1.xpose.msra.mxu0 %v143
    %806 = vmatprep.subr.mxu0 %v160
    %807 = vmatpush1.xpose.msra.mxu0 %v159
    %808 = vmatprep.subr.mxu0 %v176
    %809 = vmatpush1.xpose.msra.mxu0 %v175
    %810 = vmatprep.subr.mxu0 %v192
    %811 = vmatpush1.xpose.msra.mxu0 %v191
    %812 = vmatprep.subr.mxu0 %v208
    %813 = vmatpush1.xpose.msra.mxu0 %v207
    %814 = vmatprep.subr.mxu0 %v224
    %815 = vmatpush1.xpose.msra.mxu0 %v223
    %816 = vmatprep.subr.mxu0 %v240
    %817 = vmatpush1.xpose.msra.mxu0 %v239
    %818 = vmatprep.subr.mxu0 %v256
    %819 = vmatpush1.xpose.msra.mxu0 %v255
    %820 = vmatprep.subr.mxu0 %v272
    %821 = vmatpush1.xpose.msra.mxu0 %v271
    %822 = vmatprep.subr.mxu0 0.0
    %823 = vmatpush1.xpose.msra.mxu0 0.0
    %824 = vmatprep.subr.mxu0 0.0
    %825 = vmatpush1.xpose.msra.mxu0 0.0
    %826 = vmatprep.subr.mxu0 0.0
    %827 = vmatpush1.xpose.msra.mxu0 0.0
    %828 = vmatprep.subr.mxu0 0.0
    %829 = vmatpush1.xpose.msra.mxu0 0.0
    %830 = vmatprep.subr.mxu0 0.0
    %831 = vmatpush1.xpose.msra.mxu0 0.0
    %832 = vmatprep.subr.mxu0 0.0
    %833 = vmatpush1.xpose.msra.mxu0 0.0
    %834 = vmatprep.subr.mxu0 0.0
    %835 = vmatpush1.xpose.msra.mxu0 0.0
    %836 = vmatprep.subr.mxu0 0.0
    %837 = vmatpush1.xpose.msra.mxu0 0.0
    %838 = vmatprep.subr.mxu0 0.0
    %839 = vmatpush1.xpose.msra.mxu0 0.0
    %840 = vmatprep.subr.mxu0 0.0
    %841 = vmatpush1.xpose.msra.mxu0 0.0
    %842 = vmatprep.subr.mxu0 0.0
    %843 = vmatpush1.xpose.msra.mxu0 0.0
    %844 = vmatprep.subr.mxu0 0.0
    %845 = vmatpush1.xpose.msra.mxu0 0.0
    %846 = vmatprep.subr.mxu0 0.0
    %847 = vmatpush1.xpose.msra.mxu0 0.0
    %848 = vmatprep.subr.mxu0 0.0
    %849 = vmatpush1.xpose.msra.mxu0 0.0
    %850 = vmatprep.subr.mxu0 0.0
    %851 = vmatpush1.xpose.msra.mxu0 0.0
    %852 = vmatprep.subr.mxu0 0.0
    %853 = vmatpush1.xpose.msra.mxu0 0.0
    %854 = vmatprep.mubr.f32.mxu0 %v352
    %855 = vmatmul.mubr.f32.gmra.mrb[0].mxu0 %v344
    %v856 = vpop.f32.mrb[0].mxu0
    %v857 = vadd.f32 %v787, %v856
    %v858 = vpop.f32.mrb[0].mxu0
    %859 = vdwg.mxu0
    %860 = vmatprep.subr.mxu0 %v34
    %861 = vmatpush1.xpose.msra.mxu0 %v33
    %862 = vmatprep.subr.mxu0 %v50
    %863 = vmatpush1.xpose.msra.mxu0 %v49
    %864 = vmatprep.subr.mxu0 %v66
    %865 = vmatpush1.xpose.msra.mxu0 %v65
    %866 = vmatprep.subr.mxu0 %v82
    %867 = vmatpush1.xpose.msra.mxu0 %v81
    %868 = vmatprep.subr.mxu0 %v98
    %869 = vmatpush1.xpose.msra.mxu0 %v97
    %870 = vmatprep.subr.mxu0 %v114
    %871 = vmatpush1.xpose.msra.mxu0 %v113
    %872 = vmatprep.subr.mxu0 %v130
    %873 = vmatpush1.xpose.msra.mxu0 %v129
    %874 = vmatprep.subr.mxu0 %v146
    %875 = vmatpush1.xpose.msra.mxu0 %v145
    %876 = vmatprep.subr.mxu0 %v162
    %877 = vmatpush1.xpose.msra.mxu0 %v161
    %878 = vmatprep.subr.mxu0 %v178
    %879 = vmatpush1.xpose.msra.mxu0 %v177
    %880 = vmatprep.subr.mxu0 %v194
    %881 = vmatpush1.xpose.msra.mxu0 %v193
    %882 = vmatprep.subr.mxu0 %v210
    %883 = vmatpush1.xpose.msra.mxu0 %v209
    %884 = vmatprep.subr.mxu0 %v226
    %885 = vmatpush1.xpose.msra.mxu0 %v225
    %886 = vmatprep.subr.mxu0 %v242
    %887 = vmatpush1.xpose.msra.mxu0 %v241
    %888 = vmatprep.subr.mxu0 %v258
    %889 = vmatpush1.xpose.msra.mxu0 %v257
    %890 = vmatprep.subr.mxu0 %v274
    %891 = vmatpush1.xpose.msra.mxu0 %v273
    %892 = vmatprep.subr.mxu0 0.0
    %893 = vmatpush1.xpose.msra.mxu0 0.0
    %894 = vmatprep.subr.mxu0 0.0
    %895 = vmatpush1.xpose.msra.mxu0 0.0
    %896 = vmatprep.subr.mxu0 0.0
    %897 = vmatpush1.xpose.msra.mxu0 0.0
    %898 = vmatprep.subr.mxu0 0.0
    %899 = vmatpush1.xpose.msra.mxu0 0.0
    %900 = vmatprep.subr.mxu0 0.0
    %901 = vmatpush1.xpose.msra.mxu0 0.0
    %902 = vmatprep.subr.mxu0 0.0
    %903 = vmatpush1.xpose.msra.mxu0 0.0
    %904 = vmatprep.subr.mxu0 0.0
    %905 = vmatpush1.xpose.msra.mxu0 0.0
    %906 = vmatprep.subr.mxu0 0.0
    %907 = vmatpush1.xpose.msra.mxu0 0.0
    %908 = vmatprep.subr.mxu0 0.0
    %909 = vmatpush1.xpose.msra.mxu0 0.0
    %910 = vmatprep.subr.mxu0 0.0
    %911 = vmatpush1.xpose.msra.mxu0 0.0
    %912 = vmatprep.subr.mxu0 0.0
    %913 = vmatpush1.xpose.msra.mxu0 0.0
    %914 = vmatprep.subr.mxu0 0.0
    %915 = vmatpush1.xpose.msra.mxu0 0.0
    %916 = vmatprep.subr.mxu0 0.0
    %917 = vmatpush1.xpose.msra.mxu0 0.0
    %918 = vmatprep.subr.mxu0 0.0
    %919 = vmatpush1.xpose.msra.mxu0 0.0
    %920 = vmatprep.subr.mxu0 0.0
    %921 = vmatpush1.xpose.msra.mxu0 0.0
    %922 = vmatprep.subr.mxu0 0.0
    %923 = vmatpush1.xpose.msra.mxu0 0.0
    %924 = vmatprep.mubr.f32.mxu0 %v353
    %925 = vmatmul.mubr.f32.gmra.mrb[0].mxu0 %v351
    %v926 = vpop.f32.mrb[0].mxu0
    %v927 = vadd.f32 %v857, %v926
    %v928 = vpop.f32.mrb[0].mxu0
    %929 = vdwg.mxu0
    %930 = vst [vmem:[#allocation2] sm:$0x3] %v927
    // Predicated region
    $region14: #{classifier2_forward.1} parent=1 // pred_check
      _
    $region15: #{classifier2_forward.1} parent=1 // pred_check_branch
      %932 = sbr.rel (0) target = $region17
    $region16: #{classifier2_forward.1} parent=1 // pred_region
      %s934 = ssub.s32 32, 32
      %935 = vsyncadd [#allocation3], %s934
      %s937 = sshll.u32 [#allocation2], 4
      %s938 = int_to_ptr.vmem [resolvable:$true] %s937
      %940 = dma.vmem_to_hbm [thread:$0]  %s938, 32, %s3, [#allocation3]
    $region17: #{classifier2_forward.1} parent=1 // pred_fallthru
      _
    // Predicated region
    $region18: #{classifier2_forward.1} parent=1 // pred_check
      _
    $region19: #{classifier2_forward.1} parent=1 // pred_check_branch
      %942 = sbr.rel (0) target = $region21
    $region20: #{classifier2_forward.1} parent=1 // pred_region
      %943 = dma.done [#allocation3], 32
    $region21: #{classifier2_forward.1} parent=1 // pred_fallthru
      _
    %944 = vsyncpa [#allocation3], 1

</llo_original>
